<compile_context>
chip_gen: v5e
topology: v5e:2x2
jax: 0.10.0
libtpu: 0.0.40
codegen_flags: <defaults>
</compile_context>

<pallas_src>
import functools

import jax
import jax.numpy as jnp
from jax.experimental import pallas as pl
from jax.experimental.pallas import tpu as pltpu


# ----------------------------------------------------------------------------
# Pallas kernel: fused cast + row-wise LayerNorm over the feature dim
# ----------------------------------------------------------------------------
def _normalize_video_kernel(x_ref, g_ref, b_ref, o_ref, *, eps, inv_d, inv_denom):
    # x: [rows_tile, D], g/b: [1, D]  ->  o: [rows_tile, D]
    x = x_ref[...].astype(jnp.float32)                     # torch .float()
    # One pass over the block for the statistics.
    s1 = jnp.sum(x, axis=-1, keepdims=True)                # [rows, 1]
    s2 = jnp.sum(x * x, axis=-1, keepdims=True)            # [rows, 1]
    mu = s1 * inv_d
    # sum((x - mu)^2) == s2 - s1*mu ; clamp tiny negatives from cancellation.
    var = jnp.maximum((s2 - s1 * mu) * inv_denom, 0.0)
    # Per-row reciprocal ([rows, 1]) instead of a broadcast per-element divide.
    inv_std = pl.reciprocal(jnp.sqrt(var) + eps, approx=False)
    y = g_ref[...] * ((x - mu) * inv_std) + b_ref[...]
    o_ref[...] = y.astype(o_ref.dtype)


# ----------------------------------------------------------------------------
# Tiling: dtype- and generation-aware, ~4 MiB of output per block
# ----------------------------------------------------------------------------
def _choose_tiling(rows, d, in_dtype):
    """Return (block_rows, vmem_limit_bytes)."""
    in_bytes = jnp.dtype(in_dtype).itemsize
    out_bytes = 4  # budget assumes f32 output (conservative for bf16 output)

    try:
        vmem_cap = int(pltpu.get_tpu_info().vmem_capacity_bytes)
    except Exception:
        vmem_cap = 64 * 1024 * 1024  # assume smallest (v7x per-TC) if unknown

    # Scoped VMEM we ask for: half of physical, at least 32 MiB.
    vmem_limit = max(32 * 1024 * 1024, vmem_cap // 2)

    # Sublane multiple for dense packed input tiles.
    mult = 8 if in_bytes >= 4 else (16 if in_bytes == 2 else 32)

    if rows <= mult:
        return rows, vmem_limit  # full extent is always a legal block

    # ~4 MiB of output per block: per-step overhead (~0.35 us) becomes noise.
    target_rows = (4 * 1024 * 1024) // max(1, d * out_bytes)

    # VMEM budget: 2x input + 2x output double buffers + ~3 f32 block temps,
    # kept under ~45% of physical VMEM (headroom for the pipeliner).
    per_row = d * (2 * in_bytes + 2 * out_bytes + 3 * 4)
    by_vmem = int(vmem_cap * 0.45) // max(1, per_row)

    br = min(rows, target_rows, by_vmem)

    # Keep >= 4 (or >= 2) grid steps so v7x's second TensorCore gets work;
    # on v5e/v6e (1 TC) the extra step overhead is negligible.
    if rows >= 4 * mult:
        br = min(br, rows // 4)
    elif rows >= 2 * mult:
        br = min(br, rows // 2)

    br = max(mult, (br // mult) * mult)
    return br, vmem_limit


def normalize_video(video, gamma, beta, *, eps=1e-6, unbiased=True,
                    out_dtype=jnp.float32):
    """video: [..., S, D] -> LayerNorm_D(video.float()) reshaped to [-1, S, D].

    unbiased=True, eps added to std (annotated-transformer LayerNorm, the one
    this module uses). Set unbiased=False for a biased-variance variant.
    out_dtype=jnp.bfloat16 is an opt-in traffic saver (deviates from .float()).
    """
    video = jnp.asarray(video)                    # torch.as_tensor(video)
    S, D = video.shape[-2], video.shape[-1]
    x3d = video.reshape(-1, S, D)                 # torch .view(-1, S, D)
    rows = x3d.shape[0] * S
    x2d = x3d.reshape(rows, D)                    # LN is row-wise over D

    block_rows, vmem_limit = _choose_tiling(rows, D, x2d.dtype)
    grid = (pl.cdiv(rows, block_rows),)

    denom = float(max(D - 1, 1)) if unbiased else float(D)
    kernel = functools.partial(
        _normalize_video_kernel,
        eps=float(eps),
        inv_d=1.0 / float(D),
        inv_denom=1.0 / denom,
    )

    out2d = pl.pallas_call(
        kernel,
        out_shape=jax.ShapeDtypeStruct((rows, D), out_dtype),
        grid=grid,
        in_specs=[
            pl.BlockSpec((block_rows, D), lambda i: (i, 0)),
            pl.BlockSpec((1, D), lambda i: (0, 0)),
            pl.BlockSpec((1, D), lambda i: (0, 0)),
        ],
        out_specs=pl.BlockSpec((block_rows, D), lambda i: (i, 0)),
        compiler_params=pltpu.CompilerParams(
            dimension_semantics=("parallel",),    # row tiles split across TCs
            vmem_limit_bytes=int(vmem_limit),
        ),
    )(x2d,
      gamma.reshape(1, D).astype(jnp.float32),
      beta.reshape(1, D).astype(jnp.float32))

    return out2d.reshape(-1, S, D)


# ----------------------------------------------------------------------------
# Pure-JAX reference (correctness check)
# ----------------------------------------------------------------------------
def _normalize_video_ref(video, gamma, beta, eps=1e-6):
    x = jnp.asarray(video).astype(jnp.float32)
    x = x.reshape(-1, x.shape[-2], x.shape[-1])
    mu = jnp.mean(x, axis=-1, keepdims=True)
    std = jnp.std(x, axis=-1, keepdims=True, ddof=1)
    return gamma * (x - mu) / (std + eps) + beta


# ----------------------------------------------------------------------------
# Example run
# ----------------------------------------------------------------------------
if __name__ == "__main__":
    # video: [batch, clips, frames, video_dim]; forward flattens the leading
    # dims. video_dim=128 keeps the output lane-dense on TPU.
    B, CLIPS, FRAMES, VIDEO_DIM = 2, 4, 16, 128

    key = jax.random.PRNGKey(0)
    k_v, k_g, k_b = jax.random.split(key, 3)
    video = jax.random.normal(k_v, (B, CLIPS, FRAMES, VIDEO_DIM), jnp.float32) * 3.0 + 0.5
    # Module init is gamma=ones, beta=zeros; use non-trivial values so the
    # affine path is actually exercised.
    gamma = 1.0 + 0.1 * jax.random.normal(k_g, (VIDEO_DIM,), jnp.float32)
    beta = 0.1 * jax.random.normal(k_b, (VIDEO_DIM,), jnp.float32)

    # f32 input path
    out = jax.block_until_ready(normalize_video(video, gamma, beta))
    assert out.shape == (B * CLIPS, FRAMES, VIDEO_DIM)
    assert out.dtype == jnp.float32
    ref = _normalize_video_ref(video, gamma, beta)
    err = float(jnp.max(jnp.abs(out - ref)))
    assert err < 1e-4, f"f32 max abs err {err}"

    # bf16 input path (exercises the in-kernel .float() cast and 16-row packing)
    video_bf16 = video.astype(jnp.bfloat16)
    out_b = jax.block_until_ready(normalize_video(video_bf16, gamma, beta))
    ref_b = _normalize_video_ref(video_bf16, gamma, beta)
    err_b = float(jnp.max(jnp.abs(out_b - ref_b)))
    assert err_b < 5e-2, f"bf16-input max abs err {err_b}"

    print("KERNEL_OK")
</pallas_src>

<mosaic_0001>
module attributes {stable_mosaic.version = 11 : i64} {
  func.func @_normalize_video_kernel(%arg0: i32, %arg1: memref<32x128xf32, #tpu.memory_space<vmem>>, %arg2: memref<1x128xf32, #tpu.memory_space<vmem>>, %arg3: memref<1x128xf32, #tpu.memory_space<vmem>>, %arg4: memref<32x128xf32, #tpu.memory_space<vmem>>) attributes {dimension_semantics = [#tpu.dimension_semantics<parallel>], iteration_bounds = array<i64: 4>, scalar_prefetch = 0 : i64, scratch_operands = 0 : i64, tpu.core_type = #tpu.core_type<tc>, window_params = [{transform_indices = @transform_0, window_bounds = array<i64: 32, 128>}, {pipeline_mode = #tpu.pipeline_mode<synchronous>, transform_indices = @transform_1, window_bounds = array<i64: 1, 128>}, {pipeline_mode = #tpu.pipeline_mode<synchronous>, transform_indices = @transform_2, window_bounds = array<i64: 1, 128>}, {transform_indices = @transform_3, window_bounds = array<i64: 32, 128>}]} {
    %c0 = arith.constant 0 : index
    %c0_0 = arith.constant 0 : index
    %0 = vector.load %arg1[%c0, %c0_0] : memref<32x128xf32, #tpu.memory_space<vmem>>, vector<32x128xf32>
    %cst = arith.constant dense<0.000000e+00> : vector<32xf32>
    %1 = vector.multi_reduction <add>, %0, %cst [1] : vector<32x128xf32> to vector<32xf32>
    %2 = vector.shape_cast %1 : vector<32xf32> to vector<32x1xf32>
    %3 = arith.mulf %0, %0 : vector<32x128xf32>
    %cst_1 = arith.constant dense<0.000000e+00> : vector<32xf32>
    %4 = vector.multi_reduction <add>, %3, %cst_1 [1] : vector<32x128xf32> to vector<32xf32>
    %5 = vector.shape_cast %4 : vector<32xf32> to vector<32x1xf32>
    %cst_2 = arith.constant 7.812500e-03 : f32
    %6 = vector.broadcast %cst_2 : f32 to vector<32x1xf32>
    %7 = arith.mulf %2, %6 : vector<32x1xf32>
    %8 = arith.mulf %2, %7 : vector<32x1xf32>
    %9 = arith.subf %5, %8 : vector<32x1xf32>
    %cst_3 = arith.constant 0.00787401571 : f32
    %10 = vector.broadcast %cst_3 : f32 to vector<32x1xf32>
    %11 = arith.mulf %9, %10 : vector<32x1xf32>
    %cst_4 = arith.constant 0.000000e+00 : f32
    %12 = vector.broadcast %cst_4 : f32 to vector<32x1xf32>
    %13 = arith.maximumf %11, %12 : vector<32x1xf32>
    %14 = math.sqrt %13 : vector<32x1xf32>
    %cst_5 = arith.constant 9.99999997E-7 : f32
    %15 = vector.broadcast %cst_5 : f32 to vector<32x1xf32>
    %16 = arith.addf %14, %15 : vector<32x1xf32>
    %17 = tpu.reciprocal %16 : vector<32x1xf32> -> vector<32x1xf32>
    %c0_6 = arith.constant 0 : index
    %c0_7 = arith.constant 0 : index
    %18 = vector.load %arg2[%c0_6, %c0_7] : memref<1x128xf32, #tpu.memory_space<vmem>>, vector<1x128xf32>
    %19 = vector.broadcast %7 : vector<32x1xf32> to vector<32x128xf32>
    %20 = arith.subf %0, %19 : vector<32x128xf32>
    %21 = vector.broadcast %17 : vector<32x1xf32> to vector<32x128xf32>
    %22 = arith.mulf %20, %21 : vector<32x128xf32>
    %23 = vector.broadcast %18 : vector<1x128xf32> to vector<32x128xf32>
    %24 = arith.mulf %23, %22 : vector<32x128xf32>
    %c0_8 = arith.constant 0 : index
    %c0_9 = arith.constant 0 : index
    %25 = vector.load %arg3[%c0_8, %c0_9] : memref<1x128xf32, #tpu.memory_space<vmem>>, vector<1x128xf32>
    %26 = vector.broadcast %25 : vector<1x128xf32> to vector<32x128xf32>
    %27 = arith.addf %24, %26 : vector<32x128xf32>
    %c0_10 = arith.constant 0 : index
    %c0_11 = arith.constant 0 : index
    %28 = vector.load %arg4[%c0_10, %c0_11] : memref<32x128xf32, #tpu.memory_space<vmem>>, vector<32x128xf32>
    tpu.vector_store %arg4[%c0_10, %c0_11], %27 {strides = array<i32>} : memref<32x128xf32, #tpu.memory_space<vmem>>, vector<32x128xf32>,
    return
  }
  func.func @transform_0(%arg0: i32) -> (i32, i32) {
    %c0_i32 = arith.constant 0 : i32
    %c0_i32_0 = arith.constant 0 : i32
    return %arg0, %c0_i32 : i32, i32
  }
  func.func @transform_1(%arg0: i32) -> (i32, i32) {
    %c0_i32 = arith.constant 0 : i32
    %c0_i32_0 = arith.constant 0 : i32
    %c0_i32_1 = arith.constant 0 : i32
    return %c0_i32, %c0_i32_0 : i32, i32
  }
  func.func @transform_2(%arg0: i32) -> (i32, i32) {
    %c0_i32 = arith.constant 0 : i32
    %c0_i32_0 = arith.constant 0 : i32
    %c0_i32_1 = arith.constant 0 : i32
    return %c0_i32, %c0_i32_0 : i32, i32
  }
  func.func @transform_3(%arg0: i32) -> (i32, i32) {
    %c0_i32 = arith.constant 0 : i32
    %c0_i32_0 = arith.constant 0 : i32
    return %arg0, %c0_i32 : i32, i32
  }
}

</mosaic_0001>

<llo_original>
// kernel: tpu_custom_call.1
$region0: #{tpu_custom_call.1}
  #allocation0 [shape = 'u32[]', space=smem, size = 0x4, offset = 0x4, fixed_abs, tag = 'smem constant byte address 0x4 - core index']
  #allocation1 [shape = 'u32[72,128]{1,0:T(1,128)}', space=vmem, size = 0x9000, scoped, tag = 'internal scratch']
  %s0 = inlined_call_operand.hbm [shape: f32[128,128], index: 0, kind: input, shape index: {}]
  %s1 = inlined_call_operand.hbm [shape: f32[1,128], index: 1, kind: input, shape index: {}]
  %s2 = inlined_call_operand.vmem [shape: f32[1,128], index: 2, kind: input, shape index: {}]
  %s3 = inlined_call_operand.hbm [shape: f32[128,128], index: 3, kind: output, shape index: {}]
  %s4 = sld [smem:[#allocation0]]
  $region53: #{tpu_custom_call.1} parent=0
    _
  %s6 = ssub.s32 1, %s4
  %s7 = scalar_select 0, %s6, %s4
  $region1: #{tpu_custom_call.1} parent=0
    #allocation2 [shape = 'u8[32768]{0}', space=vmem, size = 0x8000, scoped, tag = 'input window, operand 0']
    #allocation3 [shape = 's32[2]{0}', space=sflag, size = 0x8, scoped, tag = 'scoped memory for tpu_custom_call.1']
    #allocation4 [shape = 's32[2]{0}', space=sflag, size = 0x8, scoped, tag = 'scoped memory for tpu_custom_call.1']
    #allocation5 [shape = 'u8[512]{0}', space=vmem, size = 0x400, scoped, tag = 'input window, operand 1, single buffered']
    #allocation6 [shape = 's32[1]{0}', space=sflag, size = 0x4, scoped, tag = 'scoped memory for tpu_custom_call.1']
    #allocation7 [shape = 'u8[32768]{0}', space=vmem, size = 0x8000, scoped, tag = 'output window, operand 0']
    %8 = vsyncpa [#allocation3], 0
    %s9 = scalar_lea.sflag [#allocation3], 1
    %10 = vsyncpa %s9, 0
    %11 = vsyncpa [#allocation6], 0
    %12 = vsyncpa [#allocation4], 0
    %s13 = scalar_lea.sflag [#allocation4], 1
    %14 = vsyncpa %s13, 0
    loop: start=0, step=1, limit=6
    $region2: #{tpu_custom_call.1} parent=1 // loop_pre_header
      _
    $region3: #{tpu_custom_call.1} parent=1 // loop_header
      %s16 = sphi 0, %s20
      %p17 = scmp.ge.s32.totalorder %s16, 6
      %s26 = sphi 0, %s28
      %s29 = sphi 0, %s26
      %s30 = sphi 0, %s29
      %s46 = sphi 0, %s30
      %s50 = sphi 0, %s50
      %s52 = sphi 0, %s50
      %s53 = sphi 0, %s52
      %s67 = sphi 0, %s53
      %s71 = sphi 0, %s71
      %s73 = sphi 0, %s71
      %s74 = sphi 0, %s73
      %s88 = sphi 0, %s74
      %s94 = sphi 0, %s96
      %s97 = sphi 0, %s94
      %s98 = sphi 0, %s97
      %s114 = sphi 0, %s98
    $region4: #{tpu_custom_call.1} parent=1 // loop_header_branch
      %19 = sbr.rel (%p17) target = $region8
    $region5: #{tpu_custom_call.1} parent=1 // loop_body
      %s21 = ssub.s32 %s16, 1
      %s22 = ssub.s32 %s16, 2
      %s23 = sadd.s32 %s16, 1
      %s24 = ssub.s32 %s16, %s23
      %p25 = scmp.eq.s32.totalorder %s24, 0
      %s27 = sadd.s32 %s26, 1
      %s28 = scalar_select %p25, %s26, %s27
      %p31 = pneg %p25
      %p32 = scmp.eq.s32.totalorder %s16, 3
      %p33 = por %p31, %p32
      %p34 = scmp.ne.s32.totalorder %s26, %s29
      %p35 = scmp.eq.s32.totalorder %s16, 0
      %p36 = por %p34, %p35
      %p37 = scmp.ne.s32.totalorder %s26, %s29
      %p38 = scmp.eq.s32.totalorder %s21, 3
      %p39 = por %p37, %p38
      %p40 = scmp.ne.s32.totalorder %s29, %s30
      %p41 = scmp.eq.s32.totalorder %s21, 0
      %p42 = por %p40, %p41
      %p43 = scmp.ne.s32.totalorder %s29, %s30
      %p44 = scmp.eq.s32.totalorder %s22, 3
      %p45 = por %p43, %p44
      %p47 = scmp.ne.s32.totalorder %s30, %s46
      %p48 = scmp.eq.s32.totalorder %s22, 0
      %p49 = por %p47, %p48
      %s51 = sadd.s32 %s50, 1
      %p54 = scmp.eq.s32.totalorder %s16, 3
      %p55 = scmp.ne.s32.totalorder %s50, %s52
      %p56 = scmp.eq.s32.totalorder %s16, 0
      %p57 = por %p55, %p56
      %p58 = scmp.ne.s32.totalorder %s50, %s52
      %p59 = scmp.eq.s32.totalorder %s21, 3
      %p60 = por %p58, %p59
      %p61 = scmp.ne.s32.totalorder %s52, %s53
      %p62 = scmp.eq.s32.totalorder %s21, 0
      %p63 = por %p61, %p62
      %p64 = scmp.ne.s32.totalorder %s52, %s53
      %p65 = scmp.eq.s32.totalorder %s22, 3
      %p66 = por %p64, %p65
      %p68 = scmp.ne.s32.totalorder %s53, %s67
      %p69 = scmp.eq.s32.totalorder %s22, 0
      %p70 = por %p68, %p69
      %s72 = sadd.s32 %s71, 1
      %p75 = scmp.eq.s32.totalorder %s16, 3
      %p76 = scmp.ne.s32.totalorder %s71, %s73
      %p77 = scmp.eq.s32.totalorder %s16, 0
      %p78 = por %p76, %p77
      %p79 = scmp.ne.s32.totalorder %s71, %s73
      %p80 = scmp.eq.s32.totalorder %s21, 3
      %p81 = por %p79, %p80
      %p82 = scmp.ne.s32.totalorder %s73, %s74
      %p83 = scmp.eq.s32.totalorder %s21, 0
      %p84 = por %p82, %p83
      %p85 = scmp.ne.s32.totalorder %s73, %s74
      %p86 = scmp.eq.s32.totalorder %s22, 3
      %p87 = por %p85, %p86
      %p89 = scmp.ne.s32.totalorder %s74, %s88
      %p90 = scmp.eq.s32.totalorder %s22, 0
      %p91 = por %p89, %p90
      %s92 = ssub.s32 %s16, %s23
      %p93 = scmp.eq.s32.totalorder %s92, 0
      %s95 = sadd.s32 %s94, 1
      %s96 = scalar_select %p93, %s94, %s95
      %p99 = pneg %p93
      %p100 = scmp.eq.s32.totalorder %s16, 3
      %p101 = por %p99, %p100
      %p102 = scmp.ne.s32.totalorder %s94, %s97
      %p103 = scmp.eq.s32.totalorder %s16, 0
      %p104 = por %p102, %p103
      %p105 = scmp.ne.s32.totalorder %s94, %s97
      %p106 = scmp.eq.s32.totalorder %s21, 3
      %p107 = por %p105, %p106
      %p108 = scmp.ne.s32.totalorder %s97, %s98
      %p109 = scmp.eq.s32.totalorder %s21, 0
      %p110 = por %p108, %p109
      %p111 = scmp.ne.s32.totalorder %s97, %s98
      %p112 = scmp.eq.s32.totalorder %s22, 3
      %p113 = por %p111, %p112
      %p115 = scmp.ne.s32.totalorder %s98, %s114
      %p116 = scmp.eq.s32.totalorder %s22, 0
      %p117 = por %p115, %p116
      %p118 = scmp.le.s32.totalorder 1, %s16
      %p119 = scmp.lt.s32.totalorder %s16, 5
      %p120 = pnand %p118, %p119
      %p121 = pneg %p120
      // Predicated region
      $region9: #{tpu_custom_call.1} parent=5 // pred_check
        _
      $region10: #{tpu_custom_call.1} parent=5 // pred_check_branch
        %123 = sbr.rel (%p120) target = $region12
      $region11: #{tpu_custom_call.1} parent=5 // pred_region
        %s124 = ssub.s32 %s16, 1
        // Predicated region
        $region13: #{tpu_custom_call.1} parent=11 // pred_check
          %p125 = pneg %p63
        $region14: #{tpu_custom_call.1} parent=11 // pred_check_branch
          %127 = sbr.rel (%p125) target = $region16
        $region15: #{tpu_custom_call.1} parent=11 // pred_region
          %129 = vsyncadd [#allocation6], 0
          %s131 = sshll.u32 %s1, 4
          %s132 = int_to_ptr.hbm [resolvable:$true] %s131
          %s133 = sshll.u32 [#allocation5], 4
          %s134 = int_to_ptr.vmem [resolvable:$true] %s133
          %136 = dma.hbm_to_vmem [thread:$0]  %s132, 16, %s134, [#allocation6]
        $region16: #{tpu_custom_call.1} parent=11 // pred_fallthru
          _
        // Predicated region
        $region17: #{tpu_custom_call.1} parent=11 // pred_check
          %p137 = pneg %p84
        $region18: #{tpu_custom_call.1} parent=11 // pred_check_branch
          %139 = sbr.rel (%p137) target = $region20
        $region19: #{tpu_custom_call.1} parent=11 // pred_region
          _
        $region20: #{tpu_custom_call.1} parent=11 // pred_fallthru
          _
      $region12: #{tpu_custom_call.1} parent=5 // pred_fallthru
        _
      %p140 = scmp.lt.s32.totalorder %s16, 4
      // Predicated region
      $region21: #{tpu_custom_call.1} parent=5 // pred_check
        %p141 = pneg %p140
      $region22: #{tpu_custom_call.1} parent=5 // pred_check_branch
        %143 = sbr.rel (%p141) target = $region24
      $region23: #{tpu_custom_call.1} parent=5 // pred_region
        // Predicated region
        $region25: #{tpu_custom_call.1} parent=23 // pred_check
          %p144 = pneg %p36
        $region26: #{tpu_custom_call.1} parent=23 // pred_check_branch
          %146 = sbr.rel (%p144) target = $region28
        $region27: #{tpu_custom_call.1} parent=23 // pred_region
          %s147 = sand.u32 %s26, 1
          %s148 = scalar_lea.sflag [#allocation3], %s147
          %s149 = sand.u32 %s26, 1
          %s150 = smul.addr %s149, 32
          %s151 = scalar_lea.vmem [#allocation2], %s150
          %s152 = smul.u32 4, %s16
          %154 = vsyncadd %s148, 0
          %s155 = smul.addr %s152, 8
          %s156 = scalar_lea.hbm %s0, %s155
          %s157 = sshll.u32 %s156, 4
          %s158 = int_to_ptr.hbm [resolvable:$true] %s157
          %s159 = sshll.u32 %s151, 4
          %s160 = int_to_ptr.vmem [resolvable:$true] %s159
          %165 = dma.hbm_to_vmem [thread:$0]  %s158, 512, %s160, %s148, 128, 128, 8
        $region28: #{tpu_custom_call.1} parent=23 // pred_fallthru
          _
      $region24: #{tpu_custom_call.1} parent=5 // pred_fallthru
        _
      %p166 = scmp.le.s32.totalorder 1, %s16
      %p167 = scmp.lt.s32.totalorder %s16, 5
      %p168 = pnand %p166, %p167
      %p169 = pneg %p168
      // Predicated region
      $region29: #{tpu_custom_call.1} parent=5 // pred_check
        _
      $region30: #{tpu_custom_call.1} parent=5 // pred_check_branch
        %171 = sbr.rel (%p168) target = $region32
      $region31: #{tpu_custom_call.1} parent=5 // pred_region
        %s172 = ssub.s32 %s16, 1
        %s173 = sand.u32 %s29, 1
        %s174 = scalar_lea.sflag [#allocation3], %s173
        %s175 = sand.u32 %s29, 1
        %s176 = smul.addr %s175, 32
        %s177 = scalar_lea.vmem [#allocation2], %s176
        // Predicated region
        $region33: #{tpu_custom_call.1} parent=31 // pred_check
          %p178 = pneg %p42
        $region34: #{tpu_custom_call.1} parent=31 // pred_check_branch
          %180 = sbr.rel (%p178) target = $region36
        $region35: #{tpu_custom_call.1} parent=31 // pred_region
          %182 = dma.done %s174, 512
        $region36: #{tpu_custom_call.1} parent=31 // pred_fallthru
          _
        // Predicated region
        $region37: #{tpu_custom_call.1} parent=31 // pred_check
          %p183 = pneg %p63
        $region38: #{tpu_custom_call.1} parent=31 // pred_check_branch
          %185 = sbr.rel (%p183) target = $region40
        $region39: #{tpu_custom_call.1} parent=31 // pred_region
          %187 = dma.done [#allocation6], 16
        $region40: #{tpu_custom_call.1} parent=31 // pred_fallthru
          _
        %s188 = sand.u32 %s29, 1
        %s189 = scalar_lea.sflag [#allocation3], %s188
        %s190 = sand.u32 %s29, 1
        %s191 = smul.addr %s190, 32
        %s192 = scalar_lea.vmem [#allocation2], %s191
        %p193 = pneg %p42
        %p194 = pneg %p39
        %p195 = pneg %p63
        %p196 = pneg %p60
        %p197 = pneg %p84
        %p198 = pneg %p81
        %p199 = pneg %p110
        %p200 = pneg %p107
        %s201 = sand.u32 %s97, 1
        %s202 = scalar_lea.sflag [#allocation4], %s201
        %s203 = sand.u32 %s97, 1
        %s204 = smul.addr %s203, 32
        %s205 = scalar_lea.vmem [#allocation7], %s204
        %s206 = smul.u32 4, %s21
        %s207 = smul.u32 4, %s21
        %v208 = vld [vmem:[%s177] sm:$0xff]
        %v209 = vld [vmem:[%s177 + $0x8] sm:$0xff]
        %v210 = vld [vmem:[%s177 + $0x10] sm:$0xff]
        %v211 = vld [vmem:[%s177 + $0x18] sm:$0xff]
        %212 = vadd.xlane.f32.xlu0 %v208
        %v213 = vpop.xlane.xlu0 %212
        %214 = vadd.xlane.f32.xlu0 %v209
        %v215 = vpop.xlane.xlu0 %214
        %216 = vadd.xlane.f32.xlu0 %v210
        %v217 = vpop.xlane.xlu0 %216
        %218 = vadd.xlane.f32.xlu0 %v211
        %v219 = vpop.xlane.xlu0 %218
        %v220 = vmul.f32 %v208, %v208
        %v221 = vmul.f32 %v209, %v209
        %v222 = vmul.f32 %v210, %v210
        %v223 = vmul.f32 %v211, %v211
        %224 = vadd.xlane.f32.xlu0 %v220
        %v225 = vpop.xlane.xlu0 %224
        %226 = vadd.xlane.f32.xlu0 %v221
        %v227 = vpop.xlane.xlu0 %226
        %228 = vadd.xlane.f32.xlu0 %v222
        %v229 = vpop.xlane.xlu0 %228
        %230 = vadd.xlane.f32.xlu0 %v223
        %v231 = vpop.xlane.xlu0 %230
        %v232 = vmul.f32 %v213, 0.0078125
        %v233 = vmul.f32 %v215, 0.0078125
        %v234 = vmul.f32 %v217, 0.0078125
        %v235 = vmul.f32 %v219, 0.0078125
        %v236 = vmul.f32 %v213, %v232
        %v237 = vmul.f32 %v215, %v233
        %v238 = vmul.f32 %v217, %v234
        %v239 = vmul.f32 %v219, %v235
        %v240 = vsub.f32 %v225, %v236
        %v241 = vsub.f32 %v227, %v237
        %v242 = vsub.f32 %v229, %v238
        %v243 = vsub.f32 %v231, %v239
        %v244 = vmul.f32 %v240, 0.007874016
        %v245 = vmul.f32 %v241, 0.007874016
        %v246 = vmul.f32 %v242, 0.007874016
        %v247 = vmul.f32 %v243, 0.007874016
        %v248 = vmax.f32 %v244, 0.0
        %v249 = vmax.f32 %v245, 0.0
        %v250 = vmax.f32 %v246, 0.0
        %v251 = vmax.f32 %v247, 0.0
        %v252 = vrsqrt.pop %v248
        %v253 = vmul.f32 %v252, %v248
        %v254 = vmul.f32 %v253, %v252
        %v255 = vmul.f32 0.5, %v254
        %v256 = vsub.f32 1.5, %v255
        %v257 = vmul.f32 %v252, %v256
        %v258 = vmul.f32 %v248, %v257
        %vm259 = vcmp.eq.f32.partialorder %v248, inf
        %v260 = vsel %vm259, %v248, %v258
        %vm261 = vcmp.eq.f32.partialorder %v248, 0.0
        %v262 = vand.u32 %v248, 2147483648
        %v263 = vsel %vm261, %v262, %v260
        %v264 = vrsqrt.pop %v249
        %v265 = vmul.f32 %v264, %v249
        %v266 = vmul.f32 %v265, %v264
        %v267 = vmul.f32 0.5, %v266
        %v268 = vsub.f32 1.5, %v267
        %v269 = vmul.f32 %v264, %v268
        %v270 = vmul.f32 %v249, %v269
        %vm271 = vcmp.eq.f32.partialorder %v249, inf
        %v272 = vsel %vm271, %v249, %v270
        %vm273 = vcmp.eq.f32.partialorder %v249, 0.0
        %v274 = vand.u32 %v249, 2147483648
        %v275 = vsel %vm273, %v274, %v272
        %v276 = vrsqrt.pop %v250
        %v277 = vmul.f32 %v276, %v250
        %v278 = vmul.f32 %v277, %v276
        %v279 = vmul.f32 0.5, %v278
        %v280 = vsub.f32 1.5, %v279
        %v281 = vmul.f32 %v276, %v280
        %v282 = vmul.f32 %v250, %v281
        %vm283 = vcmp.eq.f32.partialorder %v250, inf
        %v284 = vsel %vm283, %v250, %v282
        %vm285 = vcmp.eq.f32.partialorder %v250, 0.0
        %v286 = vand.u32 %v250, 2147483648
        %v287 = vsel %vm285, %v286, %v284
        %v288 = vrsqrt.pop %v251
        %v289 = vmul.f32 %v288, %v251
        %v290 = vmul.f32 %v289, %v288
        %v291 = vmul.f32 0.5, %v290
        %v292 = vsub.f32 1.5, %v291
        %v293 = vmul.f32 %v288, %v292
        %v294 = vmul.f32 %v251, %v293
        %vm295 = vcmp.eq.f32.partialorder %v251, inf
        %v296 = vsel %vm295, %v251, %v294
        %vm297 = vcmp.eq.f32.partialorder %v251, 0.0
        %v298 = vand.u32 %v251, 2147483648
        %v299 = vsel %vm297, %v298, %v296
        %v300 = vadd.f32 %v263, 1e-06
        %v301 = vadd.f32 %v275, 1e-06
        %v302 = vadd.f32 %v287, 1e-06
        %v303 = vadd.f32 %v299, 1e-06
        %v304 = vrcp.pop %v300
        %v305 = vmul.f32 %v300, %v304
        %v306 = vsub.f32 1.0, %v305
        %v307 = vmul.f32 %v304, %v306
        %v308 = vadd.f32 %v304, %v307
        %vm309 = vweird.f32 %v300
        %vm310 = vweird.f32 %v304
        %vm311 = vmor %vm309, %vm310
        %v312 = vsel %vm311, %v304, %v308
        %v313 = vand.u32 2147483647, %v300
        %vm314 = vcmp.eq.f32.partialorder %v313, 8.507059e+37
        %v315 = vand.u32 %v300, 2147483648
        %v316 = vor.u32 1.1754944e-38, %v315
        %v317 = vsel %vm314, %v316, %v312
        %v318 = vrcp.pop %v301
        %v319 = vmul.f32 %v301, %v318
        %v320 = vsub.f32 1.0, %v319
        %v321 = vmul.f32 %v318, %v320
        %v322 = vadd.f32 %v318, %v321
        %vm323 = vweird.f32 %v301
        %vm324 = vweird.f32 %v318
        %vm325 = vmor %vm323, %vm324
        %v326 = vsel %vm325, %v318, %v322
        %v327 = vand.u32 2147483647, %v301
        %vm328 = vcmp.eq.f32.partialorder %v327, 8.507059e+37
        %v329 = vand.u32 %v301, 2147483648
        %v330 = vor.u32 1.1754944e-38, %v329
        %v331 = vsel %vm328, %v330, %v326
        %v332 = vrcp.pop %v302
        %v333 = vmul.f32 %v302, %v332
        %v334 = vsub.f32 1.0, %v333
        %v335 = vmul.f32 %v332, %v334
        %v336 = vadd.f32 %v332, %v335
        %vm337 = vweird.f32 %v302
        %vm338 = vweird.f32 %v332
        %vm339 = vmor %vm337, %vm338
        %v340 = vsel %vm339, %v332, %v336
        %v341 = vand.u32 2147483647, %v302
        %vm342 = vcmp.eq.f32.partialorder %v341, 8.507059e+37
        %v343 = vand.u32 %v302, 2147483648
        %v344 = vor.u32 1.1754944e-38, %v343
        %v345 = vsel %vm342, %v344, %v340
        %v346 = vrcp.pop %v303
        %v347 = vmul.f32 %v303, %v346
        %v348 = vsub.f32 1.0, %v347
        %v349 = vmul.f32 %v346, %v348
        %v350 = vadd.f32 %v346, %v349
        %vm351 = vweird.f32 %v303
        %vm352 = vweird.f32 %v346
        %vm353 = vmor %vm351, %vm352
        %v354 = vsel %vm353, %v346, %v350
        %v355 = vand.u32 2147483647, %v303
        %vm356 = vcmp.eq.f32.partialorder %v355, 8.507059e+37
        %v357 = vand.u32 %v303, 2147483648
        %v358 = vor.u32 1.1754944e-38, %v357
        %v359 = vsel %vm356, %v358, %v354
        %v360 = vld [vmem:[#allocation5] sm:$0x1]
        %v361 = vsub.f32 %v208, %v232
        %v362 = vsub.f32 %v209, %v233
        %v363 = vsub.f32 %v210, %v234
        %v364 = vsub.f32 %v211, %v235
        %v365 = vmul.f32 %v361, %v317
        %v366 = vmul.f32 %v362, %v331
        %v367 = vmul.f32 %v363, %v345
        %v368 = vmul.f32 %v364, %v359
        %v370 = vperm.slane %v360, 0
        %v372 = vmul.f32 %v370, %v365
        %v373 = vmul.f32 %v370, %v366
        %v374 = vmul.f32 %v370, %v367
        %v375 = vmul.f32 %v370, %v368
        %v376 = vld [vmem:[%s2] sm:$0x1]
        %v378 = vperm.slane %v376, 0
        %v380 = vadd.f32 %v372, %v378
        %v381 = vadd.f32 %v373, %v378
        %v382 = vadd.f32 %v374, %v378
        %v383 = vadd.f32 %v375, %v378
        %384 = vst [vmem:[%s205] sm:$0xff] %v380
        %385 = vst [vmem:[%s205 + $0x8] sm:$0xff] %v381
        %386 = vst [vmem:[%s205 + $0x10] sm:$0xff] %v382
        %387 = vst [vmem:[%s205 + $0x18] sm:$0xff] %v383
        %s388 = sand.u32 %s97, 1
        %s389 = scalar_lea.sflag [#allocation4], %s388
        %s390 = sand.u32 %s97, 1
        %s391 = smul.addr %s390, 32
        %s392 = scalar_lea.vmem [#allocation7], %s391
        // Predicated region
        $region41: #{tpu_custom_call.1} parent=31 // pred_check
          %p393 = pneg %p107
        $region42: #{tpu_custom_call.1} parent=31 // pred_check_branch
          %395 = sbr.rel (%p393) target = $region44
        $region43: #{tpu_custom_call.1} parent=31 // pred_region
          %s396 = smul.u32 4, %s21
          %398 = vsyncadd %s389, 0
          %s399 = smul.addr %s396, 8
          %s400 = scalar_lea.hbm %s3, %s399
          %s401 = sshll.u32 %s392, 4
          %s402 = int_to_ptr.vmem [resolvable:$true] %s401
          %s403 = sshll.u32 %s400, 4
          %s404 = int_to_ptr.hbm [resolvable:$true] %s403
          %409 = dma.vmem_to_hbm [thread:$0]  %s402, 512, %s404, %s389, 128, 128, 8
        $region44: #{tpu_custom_call.1} parent=31 // pred_fallthru
          _
      $region32: #{tpu_custom_call.1} parent=5 // pred_fallthru
        _
      %p410 = scmp.le.s32.totalorder 2, %s16
      // Predicated region
      $region45: #{tpu_custom_call.1} parent=5 // pred_check
        %p411 = pneg %p410
      $region46: #{tpu_custom_call.1} parent=5 // pred_check_branch
        %413 = sbr.rel (%p411) target = $region48
      $region47: #{tpu_custom_call.1} parent=5 // pred_region
        %s414 = ssub.s32 %s16, 2
        // Predicated region
        $region49: #{tpu_custom_call.1} parent=47 // pred_check
          %p415 = pneg %p113
        $region50: #{tpu_custom_call.1} parent=47 // pred_check_branch
          %417 = sbr.rel (%p415) target = $region52
        $region51: #{tpu_custom_call.1} parent=47 // pred_region
          %s418 = sand.u32 %s98, 1
          %s419 = scalar_lea.sflag [#allocation4], %s418
          %s420 = sand.u32 %s98, 1
          %s421 = smul.addr %s420, 32
          %s422 = scalar_lea.vmem [#allocation7], %s421
          %424 = dma.done %s419, 512
        $region52: #{tpu_custom_call.1} parent=47 // pred_fallthru
          _
      $region48: #{tpu_custom_call.1} parent=5 // pred_fallthru
        _
    $region6: #{tpu_custom_call.1} parent=1 // loop_footer
      %s20 = sadd.s32 1, %s16
    $region7: #{tpu_custom_call.1} parent=1 // loop_footer_branch
      %15 = sbr.rel target = $region3
    $region8: #{tpu_custom_call.1} parent=1 // loop_exit
      _
    %425 = vsyncpa [#allocation3], 1
    %s426 = scalar_lea.sflag [#allocation3], 1
    %427 = vsyncpa %s426, 1
    %428 = vsyncpa [#allocation6], 1
    %429 = vsyncpa [#allocation4], 1
    %s430 = scalar_lea.sflag [#allocation4], 1
    %431 = vsyncpa %s430, 1

</llo_original>
